<compile_context>
chip_gen: v7x
topology: tpu7x:2x2x1
jax: 0.10.0
libtpu: 0.0.40
codegen_flags: <defaults>
</compile_context>

<pallas_src>
import functools

import jax
import jax.numpy as jnp
from jax.experimental import pallas as pl
from jax.experimental.pallas import tpu as pltpu

LANE = 128          # lane (last-dim) granularity
SUBLANE_BF16 = 16   # bf16 packs 16 rows per sublane-pair


def _round_up(x, m):
    return (x + m - 1) // m * m


# --------------------------------------------------------------------------
# Kernels
# --------------------------------------------------------------------------
def _mlp_tail(h1, b1, w2_ref, b2_ref, w3_ref, b3_ref, o_ref):
    """bias + ReLU (eval-mode Dropout == identity), then layers 2 and 3."""
    h = jnp.maximum(h1 + b1, 0.0)
    h = jnp.dot(h.astype(jnp.bfloat16), w2_ref[...],
                preferred_element_type=jnp.float32) + b2_ref[...]
    o_ref[...] = (
        jnp.dot(h.astype(jnp.bfloat16), w3_ref[...],
                preferred_element_type=jnp.float32) + b3_ref[...]
    ).astype(o_ref.dtype)


def fc_net_kernel_fused(x_ref, w1_ref, b1_ref, w2_ref, b2_ref, w3_ref, b3_ref,
                        o_ref):
    """All three layers fused; full input_dim in one block (1-D batch grid)."""
    h1 = jnp.dot(x_ref[...], w1_ref[...], preferred_element_type=jnp.float32)
    _mlp_tail(h1, b1_ref[...], w2_ref, b2_ref, w3_ref, b3_ref, o_ref)


def fc_net_kernel_ktiled(x_ref, w1_ref, b1_ref, w2_ref, b2_ref, w3_ref, b3_ref,
                         o_ref, acc_ref):
    """Layer 1 reduced over a K grid axis (wide input_dim); layers 2/3 fused at
    the last K step."""
    k = pl.program_id(1)

    @pl.when(k == 0)
    def _():
        acc_ref[...] = jnp.zeros_like(acc_ref)

    acc_ref[...] += jnp.dot(x_ref[...], w1_ref[...],
                            preferred_element_type=jnp.float32)

    @pl.when(k == pl.num_programs(1) - 1)
    def _():
        _mlp_tail(acc_ref[...], b1_ref[...], w2_ref, b2_ref, w3_ref, b3_ref,
                  o_ref)


# --------------------------------------------------------------------------
# Capability / hardware queries
# --------------------------------------------------------------------------
@functools.lru_cache(maxsize=None)
def _single_buffering_supported():
    """One-time probe: does this JAX accept pl.Buffered(1) on a resident input?
    The probe kernel is tiny and cannot OOM, so a broad except here cannot mask
    a real error of the main kernel."""
    try:
        def k(x_ref, o_ref):
            o_ref[...] = x_ref[...] + 1.0

        out = pl.pallas_call(
            k,
            out_shape=jax.ShapeDtypeStruct((8, 128), jnp.float32),
            grid=(2,),
            in_specs=[pl.BlockSpec((8, 128), lambda i: (0, 0),
                                   pipeline_mode=pl.Buffered(1))],
            out_specs=pl.BlockSpec((8, 128), lambda i: (0, 0)),
        )(jnp.zeros((8, 128), jnp.float32))
        jax.block_until_ready(out)
        return True
    except Exception:
        return False


def _vmem_capacity_bytes():
    try:
        info = pltpu.get_tpu_info()
        cap = getattr(info, "vmem_capacity_bytes", None)
        if cap:
            return int(cap)
    except Exception:
        pass
    return 64 * 1024 * 1024  # conservative default (v7x per-TC VMEM)


def _estimate_vmem(tm, tk, nk, H1p, H2p, Cp, single_buf):
    """VMEM footprint matching the buffering actually requested."""
    wbuf = 1 if single_buf else 2
    bytes_w1 = (wbuf if nk == 1 else 2) * tk * H1p * 2     # streamed when nk>1
    bytes_w23 = wbuf * (H1p * H2p + H2p * Cp) * 2
    bytes_bias = wbuf * (H1p + H2p + Cp) * 4
    bytes_x = 2 * tm * tk * 2                               # double-buffered x
    bytes_out = 2 * tm * Cp * 4                             # double-buffered out
    bytes_acc = (tm * H1p * 4) if nk > 1 else 0             # f32 accumulator
    bytes_live = 2 * tm * max(H1p, H2p, Cp) * 4             # live f32 intermediates
    return (bytes_w1 + bytes_w23 + bytes_bias + bytes_x + bytes_out
            + bytes_acc + bytes_live)


# --------------------------------------------------------------------------
# Parameter preparation (hoisted out of the per-forward path)
# --------------------------------------------------------------------------
def prepare_fc_net_params(params):
    """Pad feature dims to multiples of 128 and cast weights to bf16 ONCE.
    Call this once and reuse the result for every forward."""
    D, H1 = params["w1"].shape
    H2 = params["w2"].shape[1]
    C = params["w3"].shape[1]
    Dp, H1p, H2p, Cp = (_round_up(d, LANE) for d in (D, H1, H2, C))
    # TODO(synk): on v6e/v7x, padding H1p/H2p to multiples of 256 (2x256 MXU
    # tile) can give a modest MXU-utilization win for awkward hidden sizes.

    def pad2(a, rows, cols):
        a = a.reshape((-1, a.shape[-1])) if a.ndim == 2 else a.reshape(1, -1)
        return jnp.pad(a, ((0, rows - a.shape[0]), (0, cols - a.shape[1])))

    return {
        "w1": pad2(params["w1"], Dp, H1p).astype(jnp.bfloat16),
        "w2": pad2(params["w2"], H1p, H2p).astype(jnp.bfloat16),
        "w3": pad2(params["w3"], H2p, Cp).astype(jnp.bfloat16),
        "b1": pad2(params["b1"], 1, H1p).astype(jnp.float32),
        "b2": pad2(params["b2"], 1, H2p).astype(jnp.float32),
        "b3": pad2(params["b3"], 1, Cp).astype(jnp.float32),
        "dims": (D, H1, H2, C),
    }


# --------------------------------------------------------------------------
# Forward
# --------------------------------------------------------------------------
def fc_net_forward(x, params, *, tm=None):
    """x: (B, input_dim) float32. params: output of prepare_fc_net_params
    (raw params are accepted too, but then padding/cast runs per call).
    Returns (B, num_classes) float32. Inference (eval-mode) semantics."""
    prepared = params if "dims" in params else prepare_fc_net_params(params)
    D, H1, H2, C = prepared["dims"]
    w1, w2, w3 = prepared["w1"], prepared["w2"], prepared["w3"]
    b1, b2, b3 = prepared["b1"], prepared["b2"], prepared["b3"]
    Dp, H1p = w1.shape
    H2p, Cp = w2.shape[1], w3.shape[1]
    B = x.shape[0]
    assert x.shape[1] == D

    capacity = _vmem_capacity_bytes()
    vmem_limit = int(0.85 * capacity)
    budget = int(0.75 * vmem_limit)   # leave headroom for compiler scratch
    single_buf = _single_buffering_supported()

    # Bigger batch tiles on 128 MiB parts (v5e/v6e); 256 on 64 MiB parts (v7x).
    if tm is None:
        tm = 512 if capacity >= 96 * 1024 * 1024 else 256

    tm_eff = max(SUBLANE_BF16, min(tm, _round_up(B, SUBLANE_BF16)))
    # Megacore (v7x has 2 TCs): ensure >= 2 batch grid steps when possible.
    if _round_up(B, SUBLANE_BF16) <= tm_eff and B > SUBLANE_BF16:
        tm_eff = max(SUBLANE_BF16, _round_up((B + 1) // 2, SUBLANE_BF16))

    # Pick layer-1 K tiling (nk reduction steps over Dp); shrink tm if needed.
    m = Dp // LANE
    nk_candidates = [n for n in range(1, m + 1) if m % n == 0]
    chosen = None
    cur_tm = tm_eff
    while chosen is None:
        for nk in nk_candidates:
            tk = Dp // nk
            if _estimate_vmem(cur_tm, tk, nk, H1p, H2p, Cp, single_buf) <= budget:
                chosen = (cur_tm, tk, nk)
                break
        if chosen is None:
            if cur_tm <= SUBLANE_BF16:
                # TODO(synk): tile H1/H2/num_classes dims for layers that
                # outgrow VMEM even with K-tiling.
                raise NotImplementedError(
                    "FC_Net layer sizes exceed the resident-weight VMEM budget")
            cur_tm = max(SUBLANE_BF16, _round_up(cur_tm // 2, SUBLANE_BF16))
    tm_eff, tk, nk = chosen

    Bp = _round_up(B, tm_eff)
    xb = jnp.pad(x, ((0, Bp - B), (0, Dp - D))).astype(jnp.bfloat16)

    def resident(shape):
        # Constant index_map -> stays resident across the whole grid.
        idx = lambda *_: (0,) * len(shape)
        if single_buf:
            return pl.BlockSpec(shape, idx, pipeline_mode=pl.Buffered(1))
        return pl.BlockSpec(shape, idx)

    flops = 2 * Bp * (Dp * H1p + H1p * H2p + H2p * Cp)
    bytes_accessed = (xb.size * 2 + (w1.size + w2.size + w3.size) * 2
                      + (b1.size + b2.size + b3.size) * 4 + Bp * Cp * 4)
    cost = pl.CostEstimate(flops=flops, transcendentals=0,
                           bytes_accessed=bytes_accessed)

    if nk == 1:
        out = pl.pallas_call(
            fc_net_kernel_fused,
            out_shape=jax.ShapeDtypeStruct((Bp, Cp), jnp.float32),
            grid_spec=pltpu.PrefetchScalarGridSpec(
                num_scalar_prefetch=0,
                grid=(Bp // tm_eff,),
                in_specs=[
                    pl.BlockSpec((tm_eff, Dp), lambda i: (i, 0)),   # x over batch
                    resident((Dp, H1p)), resident((1, H1p)),        # layer 1
                    resident((H1p, H2p)), resident((1, H2p)),       # layer 2
                    resident((H2p, Cp)), resident((1, Cp)),         # classifier
                ],
                out_specs=pl.BlockSpec((tm_eff, Cp), lambda i: (i, 0)),
            ),
            compiler_params=pltpu.CompilerParams(
                dimension_semantics=("parallel",),
                vmem_limit_bytes=vmem_limit),
            cost_estimate=cost,
        )(xb, w1, b1, w2, b2, w3, b3)
    else:
        out = pl.pallas_call(
            fc_net_kernel_ktiled,
            out_shape=jax.ShapeDtypeStruct((Bp, Cp), jnp.float32),
            grid_spec=pltpu.PrefetchScalarGridSpec(
                num_scalar_prefetch=0,
                grid=(Bp // tm_eff, nk),
                in_specs=[
                    pl.BlockSpec((tm_eff, tk), lambda i, k: (i, k)),  # x tile
                    pl.BlockSpec((tk, H1p), lambda i, k: (k, 0)),     # w1 streamed over K
                    resident((1, H1p)),
                    resident((H1p, H2p)), resident((1, H2p)),
                    resident((H2p, Cp)), resident((1, Cp)),
                ],
                out_specs=pl.BlockSpec((tm_eff, Cp), lambda i, k: (i, 0)),
                scratch_shapes=[pltpu.VMEM((tm_eff, H1p), jnp.float32)],
            ),
            compiler_params=pltpu.CompilerParams(
                dimension_semantics=("parallel", "arbitrary"),
                vmem_limit_bytes=vmem_limit),
            cost_estimate=cost,
        )(xb, w1, b1, w2, b2, w3, b3)

    return out[:B, :C]


# --------------------------------------------------------------------------
# Init + demo
# --------------------------------------------------------------------------
def init_fc_net_params(key, input_dim, hidden_dims, num_classes):
    """nn.Linear-style init: U(-1/sqrt(fan_in), 1/sqrt(fan_in)).
    Weights stored transposed as (in, out); biases as (1, out)."""
    dims = [input_dim] + hidden_dims + [num_classes]
    params = {}
    for idx in range(len(dims) - 1):
        fan_in, fan_out = dims[idx], dims[idx + 1]
        key, kw, kb = jax.random.split(key, 3)
        bound = 1.0 / jnp.sqrt(float(fan_in))
        params[f"w{idx + 1}"] = jax.random.uniform(
            kw, (fan_in, fan_out), jnp.float32, -bound, bound)
        params[f"b{idx + 1}"] = jax.random.uniform(
            kb, (1, fan_out), jnp.float32, -bound, bound)
    return params


if __name__ == "__main__":
    # Small shapes consistent with FC_Net(input_dim, hidden_dims=[H1, H2], num_classes)
    batch, input_dim = 8, 32
    hidden_dims = [64, 32]
    num_classes = 16

    key = jax.random.PRNGKey(0)
    key, kx = jax.random.split(key)
    x = jax.random.normal(kx, (batch, input_dim), jnp.float32)
    params = init_fc_net_params(key, input_dim, hidden_dims, num_classes)

    # Pad/cast the weights ONCE (hoisted out of the per-forward path).
    prepared = prepare_fc_net_params(params)

    out = fc_net_forward(x, prepared)
    out = jax.block_until_ready(out)
    assert out.shape == (batch, num_classes)

    # Reference with identical bf16-operand / f32-accumulate semantics.
    def ref_forward(x, p):
        bf = lambda a: a.astype(jnp.bfloat16)
        h = jnp.dot(bf(x), bf(p["w1"]), preferred_element_type=jnp.float32) + p["b1"]
        h = jnp.maximum(h, 0.0)
        h = jnp.dot(bf(h), bf(p["w2"]), preferred_element_type=jnp.float32) + p["b2"]
        return jnp.dot(bf(h), bf(p["w3"]), preferred_element_type=jnp.float32) + p["b3"]

    ref_bf16 = ref_forward(x, params)
    assert jnp.allclose(out, ref_bf16, atol=1e-2, rtol=1e-2), \
        float(jnp.max(jnp.abs(out - ref_bf16)))

    # Sanity check against the pure-f32 reference (loose tol for bf16 operands).
    h = jnp.maximum(x @ params["w1"] + params["b1"], 0.0)
    h = h @ params["w2"] + params["b2"]
    ref_f32 = h @ params["w3"] + params["b3"]
    assert jnp.allclose(out, ref_f32, atol=1e-1, rtol=1e-1), \
        float(jnp.max(jnp.abs(out - ref_f32)))

    print("KERNEL_OK")
</pallas_src>

<mosaic_0001>
module attributes {stable_mosaic.version = 11 : i64} {
  func.func @k(%arg0: i32, %arg1: memref<8x128xf32, #tpu.memory_space<vmem>>, %arg2: memref<8x128xf32, #tpu.memory_space<vmem>>) attributes {dimension_semantics = [#tpu.dimension_semantics<arbitrary>], iteration_bounds = array<i64: 2>, scalar_prefetch = 0 : i64, scratch_operands = 0 : i64, tpu.core_type = #tpu.core_type<tc>, window_params = [{pipeline_mode = #tpu.pipeline_mode<synchronous>, transform_indices = @transform_0, window_bounds = array<i64: 8, 128>}, {pipeline_mode = #tpu.pipeline_mode<synchronous>, transform_indices = @transform_1, window_bounds = array<i64: 8, 128>}]} {
    %c0 = arith.constant 0 : index
    %c0_0 = arith.constant 0 : index
    %0 = vector.load %arg1[%c0, %c0_0] : memref<8x128xf32, #tpu.memory_space<vmem>>, vector<8x128xf32>
    %cst = arith.constant 1.000000e+00 : f32
    %1 = vector.broadcast %cst : f32 to vector<8x128xf32>
    %2 = arith.addf %0, %1 : vector<8x128xf32>
    %c0_1 = arith.constant 0 : index
    %c0_2 = arith.constant 0 : index
    %3 = vector.load %arg2[%c0_1, %c0_2] : memref<8x128xf32, #tpu.memory_space<vmem>>, vector<8x128xf32>
    tpu.vector_store %arg2[%c0_1, %c0_2], %2 {strides = array<i32>} : memref<8x128xf32, #tpu.memory_space<vmem>>, vector<8x128xf32>,
    return
  }
  func.func @transform_0(%arg0: i32) -> (i32, i32) {
    %c0_i32 = arith.constant 0 : i32
    %c0_i32_0 = arith.constant 0 : i32
    %c0_i32_1 = arith.constant 0 : i32
    return %c0_i32, %c0_i32_0 : i32, i32
  }
  func.func @transform_1(%arg0: i32) -> (i32, i32) {
    %c0_i32 = arith.constant 0 : i32
    %c0_i32_0 = arith.constant 0 : i32
    %c0_i32_1 = arith.constant 0 : i32
    return %c0_i32, %c0_i32_0 : i32, i32
  }
}

module attributes {stable_mosaic.version = 11 : i64} {
  func.func @fc_net_kernel_fused(%arg0: i32, %arg1: memref<16x128xbf16, #tpu.memory_space<vmem>>, %arg2: memref<128x128xbf16, #tpu.memory_space<vmem>>, %arg3: memref<1x128xf32, #tpu.memory_space<vmem>>, %arg4: memref<128x128xbf16, #tpu.memory_space<vmem>>, %arg5: memref<1x128xf32, #tpu.memory_space<vmem>>, %arg6: memref<128x128xbf16, #tpu.memory_space<vmem>>, %arg7: memref<1x128xf32, #tpu.memory_space<vmem>>, %arg8: memref<16x128xf32, #tpu.memory_space<vmem>>) attributes {dimension_semantics = [#tpu.dimension_semantics<parallel>], iteration_bounds = array<i64: 1>, scalar_prefetch = 0 : i64, scratch_operands = 0 : i64, tpu.core_type = #tpu.core_type<tc>, window_params = [{transform_indices = @transform_0, window_bounds = array<i64: 16, 128>}, {pipeline_mode = #tpu.pipeline_mode<synchronous>, transform_indices = @transform_1, window_bounds = array<i64: 128, 128>}, {pipeline_mode = #tpu.pipeline_mode<synchronous>, transform_indices = @transform_2, window_bounds = array<i64: 1, 128>}, {pipeline_mode = #tpu.pipeline_mode<synchronous>, transform_indices = @transform_3, window_bounds = array<i64: 128, 128>}, {pipeline_mode = #tpu.pipeline_mode<synchronous>, transform_indices = @transform_4, window_bounds = array<i64: 1, 128>}, {pipeline_mode = #tpu.pipeline_mode<synchronous>, transform_indices = @transform_5, window_bounds = array<i64: 128, 128>}, {pipeline_mode = #tpu.pipeline_mode<synchronous>, transform_indices = @transform_6, window_bounds = array<i64: 1, 128>}, {transform_indices = @transform_7, window_bounds = array<i64: 16, 128>}]} {
    %c0 = arith.constant 0 : index
    %c0_0 = arith.constant 0 : index
    %0 = vector.load %arg1[%c0, %c0_0] : memref<16x128xbf16, #tpu.memory_space<vmem>>, vector<16x128xbf16>
    %c0_1 = arith.constant 0 : index
    %c0_2 = arith.constant 0 : index
    %1 = vector.load %arg2[%c0_1, %c0_2] : memref<128x128xbf16, #tpu.memory_space<vmem>>, vector<128x128xbf16>
    %cst = arith.constant dense<0.000000e+00> : vector<16x128xf32>
    %2 = tpu.matmul %0, %1, %cst {dimension_numbers = #tpu.dot_dimension_numbers<[1], [0], [0], [1], [0, 0, 1, 1], [], []>} : vector<16x128xbf16>, vector<128x128xbf16>, vector<16x128xf32> -> vector<16x128xf32>
    %c0_3 = arith.constant 0 : index
    %c0_4 = arith.constant 0 : index
    %3 = vector.load %arg3[%c0_3, %c0_4] : memref<1x128xf32, #tpu.memory_space<vmem>>, vector<1x128xf32>
    %4 = vector.broadcast %3 : vector<1x128xf32> to vector<16x128xf32>
    %5 = arith.addf %2, %4 : vector<16x128xf32>
    %cst_5 = arith.constant 0.000000e+00 : f32
    %6 = vector.broadcast %cst_5 : f32 to vector<16x128xf32>
    %7 = arith.maximumf %5, %6 : vector<16x128xf32>
    %8 = arith.truncf %7 : vector<16x128xf32> to vector<16x128xbf16>
    %c0_6 = arith.constant 0 : index
    %c0_7 = arith.constant 0 : index
    %9 = vector.load %arg4[%c0_6, %c0_7] : memref<128x128xbf16, #tpu.memory_space<vmem>>, vector<128x128xbf16>
    %cst_8 = arith.constant dense<0.000000e+00> : vector<16x128xf32>
    %10 = tpu.matmul %8, %9, %cst_8 {dimension_numbers = #tpu.dot_dimension_numbers<[1], [0], [0], [1], [0, 0, 1, 1], [], []>} : vector<16x128xbf16>, vector<128x128xbf16>, vector<16x128xf32> -> vector<16x128xf32>
    %c0_9 = arith.constant 0 : index
    %c0_10 = arith.constant 0 : index
    %11 = vector.load %arg5[%c0_9, %c0_10] : memref<1x128xf32, #tpu.memory_space<vmem>>, vector<1x128xf32>
    %12 = vector.broadcast %11 : vector<1x128xf32> to vector<16x128xf32>
    %13 = arith.addf %10, %12 : vector<16x128xf32>
    %14 = arith.truncf %13 : vector<16x128xf32> to vector<16x128xbf16>
    %c0_11 = arith.constant 0 : index
    %c0_12 = arith.constant 0 : index
    %15 = vector.load %arg6[%c0_11, %c0_12] : memref<128x128xbf16, #tpu.memory_space<vmem>>, vector<128x128xbf16>
    %cst_13 = arith.constant dense<0.000000e+00> : vector<16x128xf32>
    %16 = tpu.matmul %14, %15, %cst_13 {dimension_numbers = #tpu.dot_dimension_numbers<[1], [0], [0], [1], [0, 0, 1, 1], [], []>} : vector<16x128xbf16>, vector<128x128xbf16>, vector<16x128xf32> -> vector<16x128xf32>
    %c0_14 = arith.constant 0 : index
    %c0_15 = arith.constant 0 : index
    %17 = vector.load %arg7[%c0_14, %c0_15] : memref<1x128xf32, #tpu.memory_space<vmem>>, vector<1x128xf32>
    %18 = vector.broadcast %17 : vector<1x128xf32> to vector<16x128xf32>
    %19 = arith.addf %16, %18 : vector<16x128xf32>
    %c0_16 = arith.constant 0 : index
    %c0_17 = arith.constant 0 : index
    %20 = vector.load %arg8[%c0_16, %c0_17] : memref<16x128xf32, #tpu.memory_space<vmem>>, vector<16x128xf32>
    tpu.vector_store %arg8[%c0_16, %c0_17], %19 {strides = array<i32>} : memref<16x128xf32, #tpu.memory_space<vmem>>, vector<16x128xf32>,
    return
  }
  func.func @transform_0(%arg0: i32) -> (i32, i32) {
    %c0_i32 = arith.constant 0 : i32
    %c0_i32_0 = arith.constant 0 : i32
    return %arg0, %c0_i32 : i32, i32
  }
  func.func @transform_1(%arg0: i32) -> (i32, i32) {
    %c0_i32 = arith.constant 0 : i32
    %c0_i32_0 = arith.constant 0 : i32
    %c0_i32_1 = arith.constant 0 : i32
    return %c0_i32, %c0_i32_0 : i32, i32
  }
  func.func @transform_2(%arg0: i32) -> (i32, i32) {
    %c0_i32 = arith.constant 0 : i32
    %c0_i32_0 = arith.constant 0 : i32
    %c0_i32_1 = arith.constant 0 : i32
    return %c0_i32, %c0_i32_0 : i32, i32
  }
  func.func @transform_3(%arg0: i32) -> (i32, i32) {
    %c0_i32 = arith.constant 0 : i32
    %c0_i32_0 = arith.constant 0 : i32
    %c0_i32_1 = arith.constant 0 : i32
    return %c0_i32, %c0_i32_0 : i32, i32
  }
  func.func @transform_4(%arg0: i32) -> (i32, i32) {
    %c0_i32 = arith.constant 0 : i32
    %c0_i32_0 = arith.constant 0 : i32
    %c0_i32_1 = arith.constant 0 : i32
    return %c0_i32, %c0_i32_0 : i32, i32
  }
  func.func @transform_5(%arg0: i32) -> (i32, i32) {
    %c0_i32 = arith.constant 0 : i32
    %c0_i32_0 = arith.constant 0 : i32
    %c0_i32_1 = arith.constant 0 : i32
    return %c0_i32, %c0_i32_0 : i32, i32
  }
  func.func @transform_6(%arg0: i32) -> (i32, i32) {
    %c0_i32 = arith.constant 0 : i32
    %c0_i32_0 = arith.constant 0 : i32
    %c0_i32_1 = arith.constant 0 : i32
    return %c0_i32, %c0_i32_0 : i32, i32
  }
  func.func @transform_7(%arg0: i32) -> (i32, i32) {
    %c0_i32 = arith.constant 0 : i32
    %c0_i32_0 = arith.constant 0 : i32
    return %arg0, %c0_i32 : i32, i32
  }
}

</mosaic_0001>

<llo_original>
// kernel: tpu_custom_call.1
$region0: #{tpu_custom_call.1}
  #allocation0 [shape = 'u32[]', space=smem, size = 0x4, offset = 0x4, fixed_abs, tag = 'smem constant byte address 0x4 - core index']
  #allocation1 [shape = 'u32[144,128]{1,0:T(1,128)}', space=vmem, size = 0x12000, scoped, tag = 'internal scratch']
  %s0 = inlined_call_operand.hbm [shape: f32[8,128], index: 0, kind: input, shape index: {}]
  %s1 = inlined_call_operand.hbm [shape: f32[8,128], index: 1, kind: output, shape index: {}]
  %s2 = sld [smem:[#allocation0]]
  $region41: #{tpu_custom_call.1} parent=0
    _
  %s4 = ssub.s32 1, %s2
  %s5 = scalar_select 0, %s4, %s2
  $region1: #{tpu_custom_call.1} parent=0
    #allocation2 [shape = 'u8[4096]{0}', space=vmem, size = 0x1000, scoped, tag = 'input window, operand 0, single buffered']
    #allocation3 [shape = 's32[2]{0}', space=sflag, size = 0x8, scoped, tag = 'scoped memory for tpu_custom_call.1']
    #allocation4 [shape = 's32[2]{0}', space=sflag, size = 0x8, scoped, tag = 'scoped memory for tpu_custom_call.1']
    #allocation5 [shape = 'u8[4096]{0}', space=vmem, size = 0x1000, scoped, tag = 'output window, operand 0, single buffered']
    %6 = vsyncpa [#allocation3], 0
    %7 = vsyncpa [#allocation4], 0
    loop: start=0, step=1, limit=4
    $region2: #{tpu_custom_call.1} parent=1 // loop_pre_header
      _
    $region3: #{tpu_custom_call.1} parent=1 // loop_header
      %s9 = sphi 0, %s13
      %p10 = scmp.ge.s32.totalorder %s9, 4
      %s17 = sphi 0, %s17
      %s19 = sphi 0, %s17
      %s20 = sphi 0, %s19
      %s34 = sphi 0, %s20
      %s38 = sphi 0, %s38
      %s40 = sphi 0, %s38
      %s41 = sphi 0, %s40
      %s55 = sphi 0, %s41
    $region4: #{tpu_custom_call.1} parent=1 // loop_header_branch
      %12 = sbr.rel (%p10) target = $region8
    $region5: #{tpu_custom_call.1} parent=1 // loop_body
      %s14 = ssub.s32 %s9, 1
      %s15 = ssub.s32 %s9, 2
      %s16 = sadd.s32 %s9, 1
      %s18 = sadd.s32 %s17, 1
      %p21 = scmp.eq.s32.totalorder %s9, 1
      %p22 = scmp.ne.s32.totalorder %s17, %s19
      %p23 = scmp.eq.s32.totalorder %s9, 0
      %p24 = por %p22, %p23
      %p25 = scmp.ne.s32.totalorder %s17, %s19
      %p26 = scmp.eq.s32.totalorder %s14, 1
      %p27 = por %p25, %p26
      %p28 = scmp.ne.s32.totalorder %s19, %s20
      %p29 = scmp.eq.s32.totalorder %s14, 0
      %p30 = por %p28, %p29
      %p31 = scmp.ne.s32.totalorder %s19, %s20
      %p32 = scmp.eq.s32.totalorder %s15, 1
      %p33 = por %p31, %p32
      %p35 = scmp.ne.s32.totalorder %s20, %s34
      %p36 = scmp.eq.s32.totalorder %s15, 0
      %p37 = por %p35, %p36
      %s39 = sadd.s32 %s38, 1
      %p42 = scmp.eq.s32.totalorder %s9, 1
      %p43 = scmp.ne.s32.totalorder %s38, %s40
      %p44 = scmp.eq.s32.totalorder %s9, 0
      %p45 = por %p43, %p44
      %p46 = scmp.ne.s32.totalorder %s38, %s40
      %p47 = scmp.eq.s32.totalorder %s14, 1
      %p48 = por %p46, %p47
      %p49 = scmp.ne.s32.totalorder %s40, %s41
      %p50 = scmp.eq.s32.totalorder %s14, 0
      %p51 = por %p49, %p50
      %p52 = scmp.ne.s32.totalorder %s40, %s41
      %p53 = scmp.eq.s32.totalorder %s15, 1
      %p54 = por %p52, %p53
      %p56 = scmp.ne.s32.totalorder %s41, %s55
      %p57 = scmp.eq.s32.totalorder %s15, 0
      %p58 = por %p56, %p57
      %p59 = scmp.le.s32.totalorder 1, %s9
      %p60 = scmp.lt.s32.totalorder %s9, 3
      %p61 = pnand %p59, %p60
      %p62 = pneg %p61
      // Predicated region
      $region9: #{tpu_custom_call.1} parent=5 // pred_check
        _
      $region10: #{tpu_custom_call.1} parent=5 // pred_check_branch
        %64 = sbr.rel (%p61) target = $region12
      $region11: #{tpu_custom_call.1} parent=5 // pred_region
        %s65 = ssub.s32 %s9, 1
        // Predicated region
        $region13: #{tpu_custom_call.1} parent=11 // pred_check
          %p66 = pneg %p30
        $region14: #{tpu_custom_call.1} parent=11 // pred_check_branch
          %68 = sbr.rel (%p66) target = $region16
        $region15: #{tpu_custom_call.1} parent=11 // pred_region
          %s70 = ssub.s32 128, 128
          %71 = vsyncadd [#allocation3], %s70
          %s73 = sshll.u32 [#allocation2], 4
          %s74 = int_to_ptr.vmem [resolvable:$true] %s73
          %76 = dma.hbm_to_vmem [thread:$0]  %s0, 128, %s74, [#allocation3]
        $region16: #{tpu_custom_call.1} parent=11 // pred_fallthru
          _
      $region12: #{tpu_custom_call.1} parent=5 // pred_fallthru
        _
      %p77 = scmp.lt.s32.totalorder %s9, 2
      // Predicated region
      $region17: #{tpu_custom_call.1} parent=5 // pred_check
        %p78 = pneg %p77
      $region18: #{tpu_custom_call.1} parent=5 // pred_check_branch
        %80 = sbr.rel (%p78) target = $region20
      $region19: #{tpu_custom_call.1} parent=5 // pred_region
        _
      $region20: #{tpu_custom_call.1} parent=5 // pred_fallthru
        _
      %p81 = scmp.le.s32.totalorder 1, %s9
      %p82 = scmp.lt.s32.totalorder %s9, 3
      %p83 = pnand %p81, %p82
      %p84 = pneg %p83
      // Predicated region
      $region21: #{tpu_custom_call.1} parent=5 // pred_check
        _
      $region22: #{tpu_custom_call.1} parent=5 // pred_check_branch
        %86 = sbr.rel (%p83) target = $region24
      $region23: #{tpu_custom_call.1} parent=5 // pred_region
        %s87 = ssub.s32 %s9, 1
        // Predicated region
        $region25: #{tpu_custom_call.1} parent=23 // pred_check
          %p88 = pneg %p30
        $region26: #{tpu_custom_call.1} parent=23 // pred_check_branch
          %90 = sbr.rel (%p88) target = $region28
        $region27: #{tpu_custom_call.1} parent=23 // pred_region
          %91 = dma.done [#allocation3], 128
        $region28: #{tpu_custom_call.1} parent=23 // pred_fallthru
          _
        %p92 = pneg %p30
        %p93 = pneg %p27
        %p94 = pneg %p51
        %p95 = pneg %p48
        %v96 = vld [vmem:[#allocation2] sm:$0xff]
        %v97 = vadd.f32 %v96, 1.0
        %98 = vst [vmem:[#allocation5] sm:$0xff] %v97
        // Predicated region
        $region29: #{tpu_custom_call.1} parent=23 // pred_check
          %p99 = pneg %p48
        $region30: #{tpu_custom_call.1} parent=23 // pred_check_branch
          %101 = sbr.rel (%p99) target = $region32
        $region31: #{tpu_custom_call.1} parent=23 // pred_region
          %s103 = ssub.s32 128, 128
          %104 = vsyncadd [#allocation4], %s103
          %s106 = sshll.u32 [#allocation5], 4
          %s107 = int_to_ptr.vmem [resolvable:$true] %s106
          %109 = dma.vmem_to_hbm [thread:$0]  %s107, 128, %s1, [#allocation4]
        $region32: #{tpu_custom_call.1} parent=23 // pred_fallthru
          _
        // Predicated region
        $region33: #{tpu_custom_call.1} parent=23 // pred_check
          %p110 = pneg %p48
        $region34: #{tpu_custom_call.1} parent=23 // pred_check_branch
          %112 = sbr.rel (%p110) target = $region36
        $region35: #{tpu_custom_call.1} parent=23 // pred_region
          %113 = dma.done [#allocation4], 128
        $region36: #{tpu_custom_call.1} parent=23 // pred_fallthru
          _
      $region24: #{tpu_custom_call.1} parent=5 // pred_fallthru
        _
      %p114 = scmp.le.s32.totalorder 2, %s9
      // Predicated region
      $region37: #{tpu_custom_call.1} parent=5 // pred_check
        %p115 = pneg %p114
      $region38: #{tpu_custom_call.1} parent=5 // pred_check_branch
        %117 = sbr.rel (%p115) target = $region40
      $region39: #{tpu_custom_call.1} parent=5 // pred_region
        %s118 = ssub.s32 %s9, 2
      $region40: #{tpu_custom_call.1} parent=5 // pred_fallthru
        _
    $region6: #{tpu_custom_call.1} parent=1 // loop_footer
      %s13 = sadd.s32 1, %s9
    $region7: #{tpu_custom_call.1} parent=1 // loop_footer_branch
      %8 = sbr.rel target = $region3
    $region8: #{tpu_custom_call.1} parent=1 // loop_exit
      _
    %119 = vsyncpa [#allocation3], 1
    %s120 = scalar_lea.sflag [#allocation3], 1
    %121 = vsyncpa %s120, 1
    %122 = vsyncpa [#allocation4], 1
    %s123 = scalar_lea.sflag [#allocation4], 1
    %124 = vsyncpa %s123, 1

// kernel: tpu_custom_call.1
$region0: #{tpu_custom_call.1}
  #allocation0 [shape = 'u32[]', space=smem, size = 0x4, offset = 0x4, fixed_abs, tag = 'smem constant byte address 0x4 - core index']
  #allocation1 [shape = 'u32[144,128]{1,0:T(1,128)}', space=vmem, size = 0x12000, scoped, tag = 'internal scratch']
  %s0 = inlined_call_operand.hbm [shape: bf16[16,128], index: 0, kind: input, shape index: {}]
  %s1 = inlined_call_operand.hbm [shape: bf16[128,128], index: 1, kind: input, shape index: {}]
  %s2 = inlined_call_operand.vmem [shape: f32[1,128], index: 2, kind: input, shape index: {}]
  %s3 = inlined_call_operand.hbm [shape: bf16[128,128], index: 3, kind: input, shape index: {}]
  %s4 = inlined_call_operand.vmem [shape: f32[1,128], index: 4, kind: input, shape index: {}]
  %s5 = inlined_call_operand.hbm [shape: bf16[128,128], index: 5, kind: input, shape index: {}]
  %s6 = inlined_call_operand.vmem [shape: f32[1,128], index: 6, kind: input, shape index: {}]
  %s7 = inlined_call_operand.hbm [shape: f32[16,128], index: 7, kind: output, shape index: {}]
  %s8 = sld [smem:[#allocation0]]
  $region54: #{tpu_custom_call.1} parent=0
    _
  %s10 = ssub.s32 1, %s8
  %s11 = scalar_select 0, %s10, %s8
  $region1: #{tpu_custom_call.1} parent=0
    #allocation2 [shape = 'u8[4096]{0}', space=vmem, size = 0x1000, scoped, tag = 'input window, operand 0, single buffered']
    #allocation3 [shape = 's32[1]{0}', space=sflag, size = 0x4, scoped, tag = 'scoped memory for tpu_custom_call.1']
    #allocation4 [shape = 's32[1]{0}', space=sflag, size = 0x4, scoped, tag = 'scoped memory for tpu_custom_call.1']
    #allocation5 [shape = 'u8[32768]{0}', space=vmem, size = 0x8000, scoped, tag = 'input window, operand 1, single buffered']
    #allocation6 [shape = 's32[1]{0}', space=sflag, size = 0x4, scoped, tag = 'scoped memory for tpu_custom_call.1']
    #allocation7 [shape = 'u8[32768]{0}', space=vmem, size = 0x8000, scoped, tag = 'input window, operand 3, single buffered']
    #allocation8 [shape = 'u8[32768]{0}', space=vmem, size = 0x8000, scoped, tag = 'input window, operand 5, single buffered']
    #allocation9 [shape = 's32[1]{0}', space=sflag, size = 0x4, scoped, tag = 'scoped memory for tpu_custom_call.1']
    #allocation10 [shape = 'u8[8192]{0}', space=vmem, size = 0x2000, scoped, tag = 'output window, operand 0, single buffered']
    %12 = vsyncpa [#allocation3], 0
    %13 = vsyncpa [#allocation6], 0
    %14 = vsyncpa [#allocation9], 0
    %15 = vsyncpa [#allocation4], 0
    // Predicated region
    $region2: #{tpu_custom_call.1} parent=1 // pred_check
      _
    $region3: #{tpu_custom_call.1} parent=1 // pred_check_branch
      %17 = sbr.rel (0) target = $region5
    $region4: #{tpu_custom_call.1} parent=1 // pred_region
      %s19 = ssub.s32 128, 128
      %20 = vsyncadd [#allocation3], %s19
      %s21 = sshll.u32 [#allocation2], 4
      %s22 = int_to_ptr.vmem [resolvable:$true] %s21
      %27 = dma.hbm_to_vmem [thread:$0]  %s0, 128, %s22, [#allocation3], 64, 64, 4
    $region5: #{tpu_custom_call.1} parent=1 // pred_fallthru
      _
    // Predicated region
    $region6: #{tpu_custom_call.1} parent=1 // pred_check
      _
    $region7: #{tpu_custom_call.1} parent=1 // pred_check_branch
      %29 = sbr.rel (0) target = $region9
    $region8: #{tpu_custom_call.1} parent=1 // pred_region
      %s31 = ssub.s32 1024, 1024
      %32 = vsyncadd [#allocation6], %s31
      %s33 = sshll.u32 [#allocation5], 4
      %s34 = int_to_ptr.vmem [resolvable:$true] %s33
      %39 = dma.hbm_to_vmem [thread:$0]  %s1, 1024, %s34, [#allocation6], 64, 64, 4
    $region9: #{tpu_custom_call.1} parent=1 // pred_fallthru
      _
    // Predicated region
    $region10: #{tpu_custom_call.1} parent=1 // pred_check
      _
    $region11: #{tpu_custom_call.1} parent=1 // pred_check_branch
      %41 = sbr.rel (0) target = $region13
    $region12: #{tpu_custom_call.1} parent=1 // pred_region
      _
    $region13: #{tpu_custom_call.1} parent=1 // pred_fallthru
      _
    // Predicated region
    $region14: #{tpu_custom_call.1} parent=1 // pred_check
      _
    $region15: #{tpu_custom_call.1} parent=1 // pred_check_branch
      %43 = sbr.rel (0) target = $region17
    $region16: #{tpu_custom_call.1} parent=1 // pred_region
      %s45 = ssub.s32 1024, 1024
      %46 = vsyncadd [#allocation6], %s45
      %s47 = sshll.u32 [#allocation7], 4
      %s48 = int_to_ptr.vmem [resolvable:$true] %s47
      %53 = dma.hbm_to_vmem [thread:$0]  %s3, 1024, %s48, [#allocation6], 64, 64, 4
    $region17: #{tpu_custom_call.1} parent=1 // pred_fallthru
      _
    // Predicated region
    $region18: #{tpu_custom_call.1} parent=1 // pred_check
      _
    $region19: #{tpu_custom_call.1} parent=1 // pred_check_branch
      %55 = sbr.rel (0) target = $region21
    $region20: #{tpu_custom_call.1} parent=1 // pred_region
      _
    $region21: #{tpu_custom_call.1} parent=1 // pred_fallthru
      _
    // Predicated region
    $region22: #{tpu_custom_call.1} parent=1 // pred_check
      _
    $region23: #{tpu_custom_call.1} parent=1 // pred_check_branch
      %57 = sbr.rel (0) target = $region25
    $region24: #{tpu_custom_call.1} parent=1 // pred_region
      %s59 = ssub.s32 1024, 1024
      %60 = vsyncadd [#allocation9], %s59
      %s61 = sshll.u32 [#allocation8], 4
      %s62 = int_to_ptr.vmem [resolvable:$true] %s61
      %67 = dma.hbm_to_vmem [thread:$0]  %s5, 1024, %s62, [#allocation9], 64, 64, 4
    $region25: #{tpu_custom_call.1} parent=1 // pred_fallthru
      _
    // Predicated region
    $region26: #{tpu_custom_call.1} parent=1 // pred_check
      _
    $region27: #{tpu_custom_call.1} parent=1 // pred_check_branch
      %69 = sbr.rel (0) target = $region29
    $region28: #{tpu_custom_call.1} parent=1 // pred_region
      _
    $region29: #{tpu_custom_call.1} parent=1 // pred_fallthru
      _
    // Predicated region
    $region30: #{tpu_custom_call.1} parent=1 // pred_check
      _
    $region31: #{tpu_custom_call.1} parent=1 // pred_check_branch
      %71 = sbr.rel (0) target = $region33
    $region32: #{tpu_custom_call.1} parent=1 // pred_region
      %72 = dma.done [#allocation3], 128
    $region33: #{tpu_custom_call.1} parent=1 // pred_fallthru
      _
    // Predicated region
    $region34: #{tpu_custom_call.1} parent=1 // pred_check
      _
    $region35: #{tpu_custom_call.1} parent=1 // pred_check_branch
      %74 = sbr.rel (0) target = $region37
    $region36: #{tpu_custom_call.1} parent=1 // pred_region
      %75 = dma.done [#allocation6], 1024
    $region37: #{tpu_custom_call.1} parent=1 // pred_fallthru
      _
    // Predicated region
    $region38: #{tpu_custom_call.1} parent=1 // pred_check
      _
    $region39: #{tpu_custom_call.1} parent=1 // pred_check_branch
      %77 = sbr.rel (0) target = $region41
    $region40: #{tpu_custom_call.1} parent=1 // pred_region
      %78 = dma.done [#allocation6], 1024
    $region41: #{tpu_custom_call.1} parent=1 // pred_fallthru
      _
    // Predicated region
    $region42: #{tpu_custom_call.1} parent=1 // pred_check
      _
    $region43: #{tpu_custom_call.1} parent=1 // pred_check_branch
      %80 = sbr.rel (0) target = $region45
    $region44: #{tpu_custom_call.1} parent=1 // pred_region
      %81 = dma.done [#allocation9], 1024
    $region45: #{tpu_custom_call.1} parent=1 // pred_fallthru
      _
    %v83 = vld [vmem:[#allocation2] sm:$0xf]
    %v84 = vld [vmem:[#allocation2 + $0x4] sm:$0xf]
    %v85 = vld [vmem:[#allocation5] sm:$0xf]
    %v86 = vld [vmem:[#allocation5 + $0x4] sm:$0xf]
    %v87 = vld [vmem:[#allocation5 + $0x8] sm:$0xf]
    %v88 = vld [vmem:[#allocation5 + $0xc] sm:$0xf]
    %v89 = vld [vmem:[#allocation5 + $0x10] sm:$0xf]
    %v90 = vld [vmem:[#allocation5 + $0x14] sm:$0xf]
    %v91 = vld [vmem:[#allocation5 + $0x18] sm:$0xf]
    %v92 = vld [vmem:[#allocation5 + $0x1c] sm:$0xf]
    %v93 = vld [vmem:[#allocation5 + $0x20] sm:$0xf]
    %v94 = vld [vmem:[#allocation5 + $0x24] sm:$0xf]
    %v95 = vld [vmem:[#allocation5 + $0x28] sm:$0xf]
    %v96 = vld [vmem:[#allocation5 + $0x2c] sm:$0xf]
    %v97 = vld [vmem:[#allocation5 + $0x30] sm:$0xf]
    %v98 = vld [vmem:[#allocation5 + $0x34] sm:$0xf]
    %v99 = vld [vmem:[#allocation5 + $0x38] sm:$0xf]
    %v100 = vld [vmem:[#allocation5 + $0x3c] sm:$0xf]
    %v101 = vld [vmem:[%s2] sm:$0x1]
    %v103 = vlaneseq
    %v104 = vshrl.u32 %v103, 7
    %v105 = vsub.s32 0, %v104
    %v106 = vrot.slane %v101, %v105
    %v110 = vunpack.c.l.b16 %v83
    %v111 = vunpack.c.l.b16 %v84
    %v112 = vpack.c.b16 %v111, %v110
    %v130 = vunpack.c.l.b16 %v85
    %v131 = vunpack.c.l.b16 %v86
    %v132 = vunpack.c.l.b16 %v87
    %v133 = vunpack.c.l.b16 %v88
    %v134 = vunpack.c.l.b16 %v89
    %v135 = vunpack.c.l.b16 %v90
    %v136 = vunpack.c.l.b16 %v91
    %v137 = vunpack.c.l.b16 %v92
    %v138 = vunpack.c.l.b16 %v93
    %v139 = vunpack.c.l.b16 %v94
    %v140 = vunpack.c.l.b16 %v95
    %v141 = vunpack.c.l.b16 %v96
    %v142 = vunpack.c.l.b16 %v97
    %v143 = vunpack.c.l.b16 %v98
    %v144 = vunpack.c.l.b16 %v99
    %v145 = vunpack.c.l.b16 %v100
    %v146 = vpack.c.b16 %v131, %v130
    %v147 = vpack.c.b16 %v133, %v132
    %v148 = vpack.c.b16 %v135, %v134
    %v149 = vpack.c.b16 %v137, %v136
    %v150 = vpack.c.b16 %v139, %v138
    %v151 = vpack.c.b16 %v141, %v140
    %v152 = vpack.c.b16 %v143, %v142
    %v153 = vpack.c.b16 %v145, %v144
    %162 = vmatprep.subr.bf16.mxu0 0
    %163 = vmatpush1.bf16.msra.mxu0 %v146
    %164 = vmatprep.subr.bf16.mxu0 0
    %165 = vmatpush1.bf16.msra.mxu0 %v147
    %166 = vmatprep.subr.bf16.mxu0 0
    %167 = vmatpush1.bf16.msra.mxu0 %v148
    %168 = vmatprep.subr.bf16.mxu0 0
    %169 = vmatpush1.bf16.msra.mxu0 %v149
    %170 = vmatprep.subr.bf16.mxu0 0
    %171 = vmatpush1.bf16.msra.mxu0 %v150
    %172 = vmatprep.subr.bf16.mxu0 0
    %173 = vmatpush1.bf16.msra.mxu0 %v151
    %174 = vmatprep.subr.bf16.mxu0 0
    %175 = vmatpush1.bf16.msra.mxu0 %v152
    %176 = vmatprep.subr.bf16.mxu0 0
    %177 = vmatpush1.bf16.msra.mxu0 %v153
    %178 = vmatprep.subr.bf16.mxu0 0
    %179 = vmatpush1.bf16.msra.mxu0 0
    %180 = vmatprep.subr.bf16.mxu0 0
    %181 = vmatpush1.bf16.msra.mxu0 0
    %182 = vmatprep.subr.bf16.mxu0 0
    %183 = vmatpush1.bf16.msra.mxu0 0
    %184 = vmatprep.subr.bf16.mxu0 0
    %185 = vmatpush1.bf16.msra.mxu0 0
    %186 = vmatprep.subr.bf16.mxu0 0
    %187 = vmatpush1.bf16.msra.mxu0 0
    %188 = vmatprep.subr.bf16.mxu0 0
    %189 = vmatpush1.bf16.msra.mxu0 0
    %190 = vmatprep.subr.bf16.mxu0 0
    %191 = vmatpush1.bf16.msra.mxu0 0
    %192 = vmatprep.subr.bf16.mxu0 0
    %193 = vmatpush1.bf16.msra.mxu0 0
    %194 = vmatprep.mubr.bf16.mxu0 0
    %195 = vmatmul.mubr.bf16.gmra.mrb[0].mxu0 %v112
    %v196 = vpop.f32.mrb[0].mxu0
    %v197 = vadd.f32 %v106, %v196
    %v198 = vpop.f32.mrb[0].mxu0
    %v199 = vpop.f32.mrb[0].mxu0
    %v200 = vadd.f32 %v106, %v199
    %v201 = vpop.f32.mrb[0].mxu0
    %202 = vdwg.mxu0
    %v203 = vmax.f32 %v197, 0.0
    %v204 = vmax.f32 %v200, 0.0
    %v205 = vpack.c.bf16 %v204, %v203
    %v206 = vld [vmem:[#allocation7] sm:$0xf]
    %v207 = vld [vmem:[#allocation7 + $0x4] sm:$0xf]
    %v208 = vld [vmem:[#allocation7 + $0x8] sm:$0xf]
    %v209 = vld [vmem:[#allocation7 + $0xc] sm:$0xf]
    %v210 = vld [vmem:[#allocation7 + $0x10] sm:$0xf]
    %v211 = vld [vmem:[#allocation7 + $0x14] sm:$0xf]
    %v212 = vld [vmem:[#allocation7 + $0x18] sm:$0xf]
    %v213 = vld [vmem:[#allocation7 + $0x1c] sm:$0xf]
    %v214 = vld [vmem:[#allocation7 + $0x20] sm:$0xf]
    %v215 = vld [vmem:[#allocation7 + $0x24] sm:$0xf]
    %v216 = vld [vmem:[#allocation7 + $0x28] sm:$0xf]
    %v217 = vld [vmem:[#allocation7 + $0x2c] sm:$0xf]
    %v218 = vld [vmem:[#allocation7 + $0x30] sm:$0xf]
    %v219 = vld [vmem:[#allocation7 + $0x34] sm:$0xf]
    %v220 = vld [vmem:[#allocation7 + $0x38] sm:$0xf]
    %v221 = vld [vmem:[#allocation7 + $0x3c] sm:$0xf]
    %v222 = vld [vmem:[%s4] sm:$0x1]
    %v224 = vlaneseq
    %v225 = vshrl.u32 %v224, 7
    %v226 = vsub.s32 0, %v225
    %v227 = vrot.slane %v222, %v226
    %v245 = vunpack.c.l.b16 %v206
    %v246 = vunpack.c.l.b16 %v207
    %v247 = vunpack.c.l.b16 %v208
    %v248 = vunpack.c.l.b16 %v209
    %v249 = vunpack.c.l.b16 %v210
    %v250 = vunpack.c.l.b16 %v211
    %v251 = vunpack.c.l.b16 %v212
    %v252 = vunpack.c.l.b16 %v213
    %v253 = vunpack.c.l.b16 %v214
    %v254 = vunpack.c.l.b16 %v215
    %v255 = vunpack.c.l.b16 %v216
    %v256 = vunpack.c.l.b16 %v217
    %v257 = vunpack.c.l.b16 %v218
    %v258 = vunpack.c.l.b16 %v219
    %v259 = vunpack.c.l.b16 %v220
    %v260 = vunpack.c.l.b16 %v221
    %v261 = vpack.c.b16 %v246, %v245
    %v262 = vpack.c.b16 %v248, %v247
    %v263 = vpack.c.b16 %v250, %v249
    %v264 = vpack.c.b16 %v252, %v251
    %v265 = vpack.c.b16 %v254, %v253
    %v266 = vpack.c.b16 %v256, %v255
    %v267 = vpack.c.b16 %v258, %v257
    %v268 = vpack.c.b16 %v260, %v259
    %277 = vmatprep.subr.bf16.mxu0 0
    %278 = vmatpush1.bf16.msra.mxu0 %v261
    %279 = vmatprep.subr.bf16.mxu0 0
    %280 = vmatpush1.bf16.msra.mxu0 %v262
    %281 = vmatprep.subr.bf16.mxu0 0
    %282 = vmatpush1.bf16.msra.mxu0 %v263
    %283 = vmatprep.subr.bf16.mxu0 0
    %284 = vmatpush1.bf16.msra.mxu0 %v264
    %285 = vmatprep.subr.bf16.mxu0 0
    %286 = vmatpush1.bf16.msra.mxu0 %v265
    %287 = vmatprep.subr.bf16.mxu0 0
    %288 = vmatpush1.bf16.msra.mxu0 %v266
    %289 = vmatprep.subr.bf16.mxu0 0
    %290 = vmatpush1.bf16.msra.mxu0 %v267
    %291 = vmatprep.subr.bf16.mxu0 0
    %292 = vmatpush1.bf16.msra.mxu0 %v268
    %293 = vmatprep.subr.bf16.mxu0 0
    %294 = vmatpush1.bf16.msra.mxu0 0
    %295 = vmatprep.subr.bf16.mxu0 0
    %296 = vmatpush1.bf16.msra.mxu0 0
    %297 = vmatprep.subr.bf16.mxu0 0
    %298 = vmatpush1.bf16.msra.mxu0 0
    %299 = vmatprep.subr.bf16.mxu0 0
    %300 = vmatpush1.bf16.msra.mxu0 0
    %301 = vmatprep.subr.bf16.mxu0 0
    %302 = vmatpush1.bf16.msra.mxu0 0
    %303 = vmatprep.subr.bf16.mxu0 0
    %304 = vmatpush1.bf16.msra.mxu0 0
    %305 = vmatprep.subr.bf16.mxu0 0
    %306 = vmatpush1.bf16.msra.mxu0 0
    %307 = vmatprep.subr.bf16.mxu0 0
    %308 = vmatpush1.bf16.msra.mxu0 0
    %309 = vmatprep.mubr.bf16.mxu0 0
    %310 = vmatmul.mubr.bf16.gmra.mrb[0].mxu0 %v205
    %v311 = vpop.f32.mrb[0].mxu0
    %v312 = vadd.f32 %v227, %v311
    %v313 = vpop.f32.mrb[0].mxu0
    %v314 = vpop.f32.mrb[0].mxu0
    %v315 = vadd.f32 %v227, %v314
    %v316 = vpop.f32.mrb[0].mxu0
    %317 = vdwg.mxu0
    %v318 = vpack.c.bf16 %v315, %v312
    %v319 = vld [vmem:[#allocation8] sm:$0xf]
    %v320 = vld [vmem:[#allocation8 + $0x4] sm:$0xf]
    %v321 = vld [vmem:[#allocation8 + $0x8] sm:$0xf]
    %v322 = vld [vmem:[#allocation8 + $0xc] sm:$0xf]
    %v323 = vld [vmem:[#allocation8 + $0x10] sm:$0xf]
    %v324 = vld [vmem:[#allocation8 + $0x14] sm:$0xf]
    %v325 = vld [vmem:[#allocation8 + $0x18] sm:$0xf]
    %v326 = vld [vmem:[#allocation8 + $0x1c] sm:$0xf]
    %v327 = vld [vmem:[#allocation8 + $0x20] sm:$0xf]
    %v328 = vld [vmem:[#allocation8 + $0x24] sm:$0xf]
    %v329 = vld [vmem:[#allocation8 + $0x28] sm:$0xf]
    %v330 = vld [vmem:[#allocation8 + $0x2c] sm:$0xf]
    %v331 = vld [vmem:[#allocation8 + $0x30] sm:$0xf]
    %v332 = vld [vmem:[#allocation8 + $0x34] sm:$0xf]
    %v333 = vld [vmem:[#allocation8 + $0x38] sm:$0xf]
    %v334 = vld [vmem:[#allocation8 + $0x3c] sm:$0xf]
    %v335 = vld [vmem:[%s6] sm:$0x1]
    %v337 = vlaneseq
    %v338 = vshrl.u32 %v337, 7
    %v339 = vsub.s32 0, %v338
    %v340 = vrot.slane %v335, %v339
    %v358 = vunpack.c.l.b16 %v319
    %v359 = vunpack.c.l.b16 %v320
    %v360 = vunpack.c.l.b16 %v321
    %v361 = vunpack.c.l.b16 %v322
    %v362 = vunpack.c.l.b16 %v323
    %v363 = vunpack.c.l.b16 %v324
    %v364 = vunpack.c.l.b16 %v325
    %v365 = vunpack.c.l.b16 %v326
    %v366 = vunpack.c.l.b16 %v327
    %v367 = vunpack.c.l.b16 %v328
    %v368 = vunpack.c.l.b16 %v329
    %v369 = vunpack.c.l.b16 %v330
    %v370 = vunpack.c.l.b16 %v331
    %v371 = vunpack.c.l.b16 %v332
    %v372 = vunpack.c.l.b16 %v333
    %v373 = vunpack.c.l.b16 %v334
    %v374 = vpack.c.b16 %v359, %v358
    %v375 = vpack.c.b16 %v361, %v360
    %v376 = vpack.c.b16 %v363, %v362
    %v377 = vpack.c.b16 %v365, %v364
    %v378 = vpack.c.b16 %v367, %v366
    %v379 = vpack.c.b16 %v369, %v368
    %v380 = vpack.c.b16 %v371, %v370
    %v381 = vpack.c.b16 %v373, %v372
    %390 = vmatprep.subr.bf16.mxu0 0
    %391 = vmatpush1.bf16.msra.mxu0 %v374
    %392 = vmatprep.subr.bf16.mxu0 0
    %393 = vmatpush1.bf16.msra.mxu0 %v375
    %394 = vmatprep.subr.bf16.mxu0 0
    %395 = vmatpush1.bf16.msra.mxu0 %v376
    %396 = vmatprep.subr.bf16.mxu0 0
    %397 = vmatpush1.bf16.msra.mxu0 %v377
    %398 = vmatprep.subr.bf16.mxu0 0
    %399 = vmatpush1.bf16.msra.mxu0 %v378
    %400 = vmatprep.subr.bf16.mxu0 0
    %401 = vmatpush1.bf16.msra.mxu0 %v379
    %402 = vmatprep.subr.bf16.mxu0 0
    %403 = vmatpush1.bf16.msra.mxu0 %v380
    %404 = vmatprep.subr.bf16.mxu0 0
    %405 = vmatpush1.bf16.msra.mxu0 %v381
    %406 = vmatprep.subr.bf16.mxu0 0
    %407 = vmatpush1.bf16.msra.mxu0 0
    %408 = vmatprep.subr.bf16.mxu0 0
    %409 = vmatpush1.bf16.msra.mxu0 0
    %410 = vmatprep.subr.bf16.mxu0 0
    %411 = vmatpush1.bf16.msra.mxu0 0
    %412 = vmatprep.subr.bf16.mxu0 0
    %413 = vmatpush1.bf16.msra.mxu0 0
    %414 = vmatprep.subr.bf16.mxu0 0
    %415 = vmatpush1.bf16.msra.mxu0 0
    %416 = vmatprep.subr.bf16.mxu0 0
    %417 = vmatpush1.bf16.msra.mxu0 0
    %418 = vmatprep.subr.bf16.mxu0 0
    %419 = vmatpush1.bf16.msra.mxu0 0
    %420 = vmatprep.subr.bf16.mxu0 0
    %421 = vmatpush1.bf16.msra.mxu0 0
    %422 = vmatprep.mubr.bf16.mxu0 0
    %423 = vmatmul.mubr.bf16.gmra.mrb[0].mxu0 %v318
    %v424 = vpop.f32.mrb[0].mxu0
    %v425 = vadd.f32 %v340, %v424
    %v426 = vpop.f32.mrb[0].mxu0
    %v427 = vpop.f32.mrb[0].mxu0
    %v428 = vadd.f32 %v340, %v427
    %v429 = vpop.f32.mrb[0].mxu0
    %430 = vdwg.mxu0
    %431 = vst [vmem:[#allocation10] sm:$0xff] %v425
    %432 = vst [vmem:[#allocation10 + $0x8] sm:$0xff] %v428
    // Predicated region
    $region46: #{tpu_custom_call.1} parent=1 // pred_check
      _
    $region47: #{tpu_custom_call.1} parent=1 // pred_check_branch
      %434 = sbr.rel (0) target = $region49
    $region48: #{tpu_custom_call.1} parent=1 // pred_region
      %s436 = ssub.s32 256, 256
      %437 = vsyncadd [#allocation4], %s436
      %s438 = sshll.u32 [#allocation10], 4
      %s439 = int_to_ptr.vmem [resolvable:$true] %s438
      %444 = dma.vmem_to_hbm [thread:$0]  %s439, 256, %s7, [#allocation4], 128, 128, 8
    $region49: #{tpu_custom_call.1} parent=1 // pred_fallthru
      _
    // Predicated region
    $region50: #{tpu_custom_call.1} parent=1 // pred_check
      _
    $region51: #{tpu_custom_call.1} parent=1 // pred_check_branch
      %446 = sbr.rel (0) target = $region53
    $region52: #{tpu_custom_call.1} parent=1 // pred_region
      %447 = dma.done [#allocation4], 256
    $region53: #{tpu_custom_call.1} parent=1 // pred_fallthru
      _
    %448 = vsyncpa [#allocation3], 1
    %449 = vsyncpa [#allocation6], 1
    %450 = vsyncpa [#allocation9], 1
    %451 = vsyncpa [#allocation4], 1

</llo_original>
